<compile_context>
chip_gen: v6e
topology: v6e:2x2x1
jax: 0.10.0
libtpu: 0.0.40
codegen_flags: <defaults>
</compile_context>

<pallas_src>
import jax
import jax.numpy as jnp
from jax.experimental import pallas as pl
from jax.experimental.pallas import tpu as pltpu


def _round_up(n, m):
    return ((n + m - 1) // m) * m


def _conv_layer_kernel(x_ref, w_ref, b_ref, o_ref, pool_ref):
    """One batch element per grid step.

    x_ref   : (L, C)     input slab (seq on sublanes, channels on lanes)
    w_ref   : (3, C, C)  conv weight with BN scale folded, w_ref[k][ci, co]
    b_ref   : (1, C)     folded conv-bias + BN shift (f32)
    o_ref   : (Lp, C)    pooled output
    pool_ref: (Lc_pad,C) f32 VMEM scratch for the strided max-pool read
    """
    L = x_ref.shape[0]
    C = x_ref.shape[1]
    Lc = L + 2                      # conv output length (padding=2, k=3)
    Lp = o_ref.shape[0]             # pooled output length

    x = x_ref[...]                  # native dtype -> MXU operands

    # Circular padding by 2 on both sides along the sequence axis.
    x_pad = jnp.concatenate([x[L - 2:, :], x, x[:2, :]], axis=0)  # (L+4, C)

    # Conv1d(k=3) as three shifted matmuls on the MXU, f32 accumulation.
    acc = jnp.dot(x_pad[0:Lc, :], w_ref[0],
                  preferred_element_type=jnp.float32)
    acc = acc + jnp.dot(x_pad[1:Lc + 1, :], w_ref[1],
                        preferred_element_type=jnp.float32)
    acc = acc + jnp.dot(x_pad[2:Lc + 2, :], w_ref[2],
                        preferred_element_type=jnp.float32)

    # Fused conv-bias + BatchNorm(eval) affine (precomputed in wrapper).
    y = acc + b_ref[...]                                   # (Lc, C), f32

    # ELU(alpha=1)
    y = jnp.where(y > 0, y, jnp.exp(jnp.minimum(y, 0.0)) - 1.0)

    # MaxPool1d(kernel=3, stride=2, padding=1):
    # windowed max at every position, then stride-2 downsample via a strided
    # sublane read from VMEM scratch.
    neg = jnp.full((1, C), -jnp.inf, dtype=jnp.float32)
    yp = jnp.concatenate([neg, y, neg], axis=0)            # (Lc+2, C)
    win = jnp.maximum(jnp.maximum(yp[0:Lc, :], yp[1:Lc + 1, :]),
                      yp[2:Lc + 2, :])                     # (Lc, C)
    pool_ref[pl.ds(0, Lc), :] = win
    o_ref[...] = pool_ref[pl.ds(0, Lp, stride=2), :].astype(o_ref.dtype)


def conv_layer_forward(x, conv_w, conv_b, bn_gamma, bn_beta, bn_mean, bn_var,
                       eps=1e-5):
    """ConvLayer.forward (inference / eval mode).

    x      : (B, L, C)
    conv_w : (C, C, 3)  PyTorch Conv1d weight (out_ch, in_ch, k)
    conv_b : (C,)       Conv1d bias
    bn_*   : (C,)       BatchNorm1d affine params + running stats
    returns: (B, (L+1)//2 + 1, C)
    """
    B, L, C = x.shape
    Lc = L + 2
    Lp = (L + 1) // 2 + 1
    Lc_pad = _round_up(Lc, 8)

    # Fold BatchNorm (eval) into the conv:
    #   y = (conv(x) + b - mean) * gamma/sqrt(var+eps) + beta
    scale = (bn_gamma.astype(jnp.float32)
             / jnp.sqrt(bn_var.astype(jnp.float32) + eps))
    shift = bn_beta.astype(jnp.float32) - bn_mean.astype(jnp.float32) * scale
    # (out, in, k) -> (k, in, out); scale lives on the output-channel (lane) axis
    w_folded = (jnp.transpose(conv_w, (2, 1, 0)).astype(jnp.float32)
                * scale[None, None, :]).astype(x.dtype)
    b_folded = (conv_b.astype(jnp.float32) * scale + shift).reshape(1, C)

    out = pl.pallas_call(
        _conv_layer_kernel,
        out_shape=jax.ShapeDtypeStruct((B, Lp, C), x.dtype),
        grid_spec=pltpu.PrefetchScalarGridSpec(
            num_scalar_prefetch=0,
            grid=(B,),
            in_specs=[
                pl.BlockSpec((None, L, C), lambda b: (b, 0, 0)),
                pl.BlockSpec((3, C, C), lambda b: (0, 0, 0)),
                pl.BlockSpec((1, C), lambda b: (0, 0)),
            ],
            out_specs=pl.BlockSpec((None, Lp, C), lambda b: (b, 0, 0)),
            scratch_shapes=[pltpu.VMEM((Lc_pad, C), jnp.float32)],
        ),
        compiler_params=pltpu.CompilerParams(
            dimension_semantics=("parallel",),
        ),
    )(x, w_folded, b_folded)
    return out


def _reference(x, conv_w, conv_b, bn_gamma, bn_beta, bn_mean, bn_var, eps=1e-5):
    """Pure-JAX reference matching the PyTorch module in eval mode."""
    xt = jnp.transpose(x, (0, 2, 1))                               # (B, C, L)
    xp = jnp.concatenate([xt[:, :, -2:], xt, xt[:, :, :2]], axis=-1)  # circular pad 2
    out = jax.lax.conv_general_dilated(
        xp, conv_w, window_strides=(1,), padding="VALID",
        dimension_numbers=("NCH", "OIH", "NCH"),
        precision=jax.lax.Precision.HIGHEST)                       # (B, C, L+2)
    out = out + conv_b[None, :, None]
    out = ((out - bn_mean[None, :, None])
           / jnp.sqrt(bn_var[None, :, None] + eps)
           * bn_gamma[None, :, None] + bn_beta[None, :, None])
    out = jnp.where(out > 0, out, jnp.exp(out) - 1.0)              # ELU
    out = jax.lax.reduce_window(out, -jnp.inf, jax.lax.max,
                                (1, 1, 3), (1, 1, 2),
                                ((0, 0), (0, 0), (1, 1)))          # MaxPool1d
    return jnp.transpose(out, (0, 2, 1))                           # (B, Lp, C)


if __name__ == "__main__":
    key = jax.random.PRNGKey(0)
    kx, kw, kb, kg, kbe, km, kv = jax.random.split(key, 7)

    B, L, C = 2, 16, 32  # batch=2, seq=16, c_in=32
    x = jax.random.normal(kx, (B, L, C), dtype=jnp.float32)
    conv_w = 0.1 * jax.random.normal(kw, (C, C, 3), dtype=jnp.float32)
    conv_b = 0.1 * jax.random.normal(kb, (C,), dtype=jnp.float32)
    bn_gamma = 1.0 + 0.1 * jax.random.normal(kg, (C,), dtype=jnp.float32)
    bn_beta = 0.1 * jax.random.normal(kbe, (C,), dtype=jnp.float32)
    bn_mean = 0.1 * jax.random.normal(km, (C,), dtype=jnp.float32)
    bn_var = jax.random.uniform(kv, (C,), minval=0.5, maxval=1.5,
                                dtype=jnp.float32)

    out = conv_layer_forward(x, conv_w, conv_b, bn_gamma, bn_beta,
                             bn_mean, bn_var)
    out = jax.block_until_ready(out)

    ref = _reference(x, conv_w, conv_b, bn_gamma, bn_beta, bn_mean, bn_var)

    Lp = (L + 1) // 2 + 1
    assert out.shape == (B, Lp, C), out.shape
    max_err = float(jnp.max(jnp.abs(out - ref)))
    assert jnp.allclose(out, ref, atol=1e-3, rtol=1e-3), max_err

    print("KERNEL_OK")
</pallas_src>

<mosaic_0001>
module attributes {stable_mosaic.version = 11 : i64} {
  func.func @_conv_layer_kernel(%arg0: i32, %arg1: memref<1x16x32xf32, #tpu.memory_space<vmem>>, %arg2: memref<3x32x32xf32, #tpu.memory_space<vmem>>, %arg3: memref<1x32xf32, #tpu.memory_space<vmem>>, %arg4: memref<1x9x32xf32, #tpu.memory_space<vmem>>, %arg5: memref<24x32xf32, #tpu.memory_space<vmem>>) attributes {dimension_semantics = [#tpu.dimension_semantics<parallel>], iteration_bounds = array<i64: 2>, scalar_prefetch = 0 : i64, scratch_operands = 1 : i64, tpu.core_type = #tpu.core_type<tc>, window_params = [{transform_indices = @transform_0, window_bounds = array<i64: 1, 16, 32>}, {pipeline_mode = #tpu.pipeline_mode<synchronous>, transform_indices = @transform_1, window_bounds = array<i64: 3, 32, 32>}, {pipeline_mode = #tpu.pipeline_mode<synchronous>, transform_indices = @transform_2, window_bounds = array<i64: 1, 32>}, {transform_indices = @transform_3, window_bounds = array<i64: 1, 9, 32>}]} {
    %c0 = arith.constant 0 : index
    %c0_0 = arith.constant 0 : index
    %c0_1 = arith.constant 0 : index
    %0 = vector.load %arg1[%c0, %c0_0, %c0_1] : memref<1x16x32xf32, #tpu.memory_space<vmem>>, vector<1x16x32xf32>
    %1 = vector.shape_cast %0 : vector<1x16x32xf32> to vector<16x32xf32>
    %2 = vector.extract_strided_slice %1 {offsets = [14, 0], sizes = [2, 32], strides = [1, 1]} : vector<16x32xf32> to vector<2x32xf32>
    %3 = vector.extract_strided_slice %1 {offsets = [0, 0], sizes = [2, 32], strides = [1, 1]} : vector<16x32xf32> to vector<2x32xf32>
    %4 = tpu.concatenate %2, %1, %3 in 0 : vector<2x32xf32>, vector<16x32xf32>, vector<2x32xf32> -> vector<20x32xf32>
    %5 = vector.extract_strided_slice %4 {offsets = [0, 0], sizes = [18, 32], strides = [1, 1]} : vector<20x32xf32> to vector<18x32xf32>
    %c0_2 = arith.constant 0 : index
    %c0_3 = arith.constant 0 : index
    %c0_4 = arith.constant 0 : index
    %6 = vector.load %arg2[%c0_2, %c0_3, %c0_4] : memref<3x32x32xf32, #tpu.memory_space<vmem>>, vector<1x32x32xf32>
    %7 = vector.shape_cast %6 : vector<1x32x32xf32> to vector<32x32xf32>
    %cst = arith.constant dense<0.000000e+00> : vector<18x32xf32>
    %8 = tpu.matmul %5, %7, %cst {dimension_numbers = #tpu.dot_dimension_numbers<[1], [0], [0], [1], [0, 0, 1, 1], [], []>} : vector<18x32xf32>, vector<32x32xf32>, vector<18x32xf32> -> vector<18x32xf32>
    %9 = vector.extract_strided_slice %4 {offsets = [1, 0], sizes = [18, 32], strides = [1, 1]} : vector<20x32xf32> to vector<18x32xf32>
    %c1 = arith.constant 1 : index
    %c0_5 = arith.constant 0 : index
    %c0_6 = arith.constant 0 : index
    %10 = vector.load %arg2[%c1, %c0_5, %c0_6] : memref<3x32x32xf32, #tpu.memory_space<vmem>>, vector<1x32x32xf32>
    %11 = vector.shape_cast %10 : vector<1x32x32xf32> to vector<32x32xf32>
    %cst_7 = arith.constant dense<0.000000e+00> : vector<18x32xf32>
    %12 = tpu.matmul %9, %11, %cst_7 {dimension_numbers = #tpu.dot_dimension_numbers<[1], [0], [0], [1], [0, 0, 1, 1], [], []>} : vector<18x32xf32>, vector<32x32xf32>, vector<18x32xf32> -> vector<18x32xf32>
    %13 = arith.addf %8, %12 : vector<18x32xf32>
    %14 = vector.extract_strided_slice %4 {offsets = [2, 0], sizes = [18, 32], strides = [1, 1]} : vector<20x32xf32> to vector<18x32xf32>
    %c2 = arith.constant 2 : index
    %c0_8 = arith.constant 0 : index
    %c0_9 = arith.constant 0 : index
    %15 = vector.load %arg2[%c2, %c0_8, %c0_9] : memref<3x32x32xf32, #tpu.memory_space<vmem>>, vector<1x32x32xf32>
    %16 = vector.shape_cast %15 : vector<1x32x32xf32> to vector<32x32xf32>
    %cst_10 = arith.constant dense<0.000000e+00> : vector<18x32xf32>
    %17 = tpu.matmul %14, %16, %cst_10 {dimension_numbers = #tpu.dot_dimension_numbers<[1], [0], [0], [1], [0, 0, 1, 1], [], []>} : vector<18x32xf32>, vector<32x32xf32>, vector<18x32xf32> -> vector<18x32xf32>
    %18 = arith.addf %13, %17 : vector<18x32xf32>
    %c0_11 = arith.constant 0 : index
    %c0_12 = arith.constant 0 : index
    %19 = vector.load %arg3[%c0_11, %c0_12] : memref<1x32xf32, #tpu.memory_space<vmem>>, vector<1x32xf32>
    %20 = vector.broadcast %19 : vector<1x32xf32> to vector<18x32xf32>
    %21 = arith.addf %18, %20 : vector<18x32xf32>
    %cst_13 = arith.constant 0.000000e+00 : f32
    %22 = vector.broadcast %cst_13 : f32 to vector<18x32xf32>
    %23 = arith.cmpf ogt, %21, %22 : vector<18x32xf32>
    %cst_14 = arith.constant 0.000000e+00 : f32
    %24 = vector.broadcast %cst_14 : f32 to vector<18x32xf32>
    %25 = arith.minimumf %21, %24 : vector<18x32xf32>
    %26 = math.exp %25 : vector<18x32xf32>
    %cst_15 = arith.constant 1.000000e+00 : f32
    %27 = vector.broadcast %cst_15 : f32 to vector<18x32xf32>
    %28 = arith.subf %26, %27 : vector<18x32xf32>
    %29 = arith.select %23, %21, %28 : vector<18x32xi1>, vector<18x32xf32>
    %cst_16 = arith.constant 0xFF800000 : f32
    %30 = vector.broadcast %cst_16 : f32 to vector<1x32xf32>
    %31 = tpu.concatenate %30, %29, %30 in 0 : vector<1x32xf32>, vector<18x32xf32>, vector<1x32xf32> -> vector<20x32xf32>
    %32 = vector.extract_strided_slice %31 {offsets = [0, 0], sizes = [18, 32], strides = [1, 1]} : vector<20x32xf32> to vector<18x32xf32>
    %33 = vector.extract_strided_slice %31 {offsets = [1, 0], sizes = [18, 32], strides = [1, 1]} : vector<20x32xf32> to vector<18x32xf32>
    %34 = arith.maximumf %32, %33 : vector<18x32xf32>
    %35 = vector.extract_strided_slice %31 {offsets = [2, 0], sizes = [18, 32], strides = [1, 1]} : vector<20x32xf32> to vector<18x32xf32>
    %36 = arith.maximumf %34, %35 : vector<18x32xf32>
    %c0_17 = arith.constant 0 : index
    %c0_18 = arith.constant 0 : index
    %37 = vector.load %arg5[%c0_17, %c0_18] : memref<24x32xf32, #tpu.memory_space<vmem>>, vector<18x32xf32>
    tpu.vector_store %arg5[%c0_17, %c0_18], %36 {strides = array<i32>} : memref<24x32xf32, #tpu.memory_space<vmem>>, vector<18x32xf32>,
    %c0_19 = arith.constant 0 : index
    %c0_20 = arith.constant 0 : index
    %38 = tpu.strided_load %arg5[%c0_19, %c0_20] {strides = array<i32: 2, 1>} : memref<24x32xf32, #tpu.memory_space<vmem>>, vector<9x32xf32>
    %c0_21 = arith.constant 0 : index
    %c0_22 = arith.constant 0 : index
    %c0_23 = arith.constant 0 : index
    %39 = vector.load %arg4[%c0_21, %c0_22, %c0_23] : memref<1x9x32xf32, #tpu.memory_space<vmem>>, vector<1x9x32xf32>
    %40 = vector.shape_cast %39 : vector<1x9x32xf32> to vector<9x32xf32>
    %41 = vector.shape_cast %38 : vector<9x32xf32> to vector<1x9x32xf32>
    tpu.vector_store %arg4[%c0_21, %c0_22, %c0_23], %41 {strides = array<i32>} : memref<1x9x32xf32, #tpu.memory_space<vmem>>, vector<1x9x32xf32>,
    return
  }
  func.func @transform_0(%arg0: i32) -> (i32, i32, i32) {
    %c0_i32 = arith.constant 0 : i32
    %c0_i32_0 = arith.constant 0 : i32
    %c0_i32_1 = arith.constant 0 : i32
    return %arg0, %c0_i32, %c0_i32_0 : i32, i32, i32
  }
  func.func @transform_1(%arg0: i32) -> (i32, i32, i32) {
    %c0_i32 = arith.constant 0 : i32
    %c0_i32_0 = arith.constant 0 : i32
    %c0_i32_1 = arith.constant 0 : i32
    %c0_i32_2 = arith.constant 0 : i32
    return %c0_i32, %c0_i32_0, %c0_i32_1 : i32, i32, i32
  }
  func.func @transform_2(%arg0: i32) -> (i32, i32) {
    %c0_i32 = arith.constant 0 : i32
    %c0_i32_0 = arith.constant 0 : i32
    %c0_i32_1 = arith.constant 0 : i32
    return %c0_i32, %c0_i32_0 : i32, i32
  }
  func.func @transform_3(%arg0: i32) -> (i32, i32, i32) {
    %c0_i32 = arith.constant 0 : i32
    %c0_i32_0 = arith.constant 0 : i32
    %c0_i32_1 = arith.constant 0 : i32
    return %arg0, %c0_i32, %c0_i32_0 : i32, i32, i32
  }
}

</mosaic_0001>

<llo_original>
// kernel: tpu_custom_call.1
$region0: #{tpu_custom_call.1}
  #allocation0 [shape = 'u32[]', space=smem, size = 0x4, offset = 0x4, fixed_abs, tag = 'smem constant byte address 0x4 - core index']
  #allocation1 [shape = 'u32[144,128]{1,0:T(1,128)}', space=vmem, size = 0x12000, scoped, tag = 'internal scratch']
  #allocation2 [shape = 'f32[24,32]{1,0:T(8,128)}', space=vmem, size = 0x3000, scoped, tag = 'scratch operand']
  %s0 = inlined_call_operand.hbm [shape: f32[2,16,32], index: 0, kind: input, shape index: {}]
  %s1 = inlined_call_operand.hbm [shape: f32[3,32,32], index: 1, kind: input, shape index: {}]
  %s2 = inlined_call_operand.vmem [shape: f32[1,32], index: 2, kind: input, shape index: {}]
  %s3 = inlined_call_operand.vmem [shape: f32[2,9,32], index: 3, kind: output, shape index: {}]
  %s4 = sld [smem:[#allocation0]]
  $region53: #{tpu_custom_call.1} parent=0
    _
  %s6 = ssub.s32 1, %s4
  %s7 = scalar_select 0, %s6, %s4
  $region1: #{tpu_custom_call.1} parent=0
    #allocation3 [shape = 'u8[16384]{0}', space=vmem, size = 0x4000, scoped, tag = 'input window, operand 0']
    #allocation4 [shape = 's32[2]{0}', space=sflag, size = 0x8, scoped, tag = 'scoped memory for tpu_custom_call.1']
    #allocation5 [shape = 'u8[49152]{0}', space=vmem, size = 0xc000, scoped, tag = 'input window, operand 1, single buffered']
    #allocation6 [shape = 's32[1]{0}', space=sflag, size = 0x4, scoped, tag = 'scoped memory for tpu_custom_call.1']
    %8 = vsyncpa [#allocation4], 0
    %s9 = scalar_lea.sflag [#allocation4], 1
    %10 = vsyncpa %s9, 0
    %11 = vsyncpa [#allocation6], 0
    loop: start=0, step=1, limit=4
    $region2: #{tpu_custom_call.1} parent=1 // loop_pre_header
      _
    $region3: #{tpu_custom_call.1} parent=1 // loop_header
      %s13 = sphi 0, %s17
      %p14 = scmp.ge.s32.totalorder %s13, 4
      %s23 = sphi 0, %s25
      %s26 = sphi 0, %s23
      %s27 = sphi 0, %s26
      %s43 = sphi 0, %s27
      %s47 = sphi 0, %s47
      %s49 = sphi 0, %s47
      %s50 = sphi 0, %s49
      %s64 = sphi 0, %s50
      %s68 = sphi 0, %s68
      %s70 = sphi 0, %s68
      %s71 = sphi 0, %s70
      %s85 = sphi 0, %s71
      %s91 = sphi 0, %s93
      %s94 = sphi 0, %s91
      %s95 = sphi 0, %s94
      %s111 = sphi 0, %s95
    $region4: #{tpu_custom_call.1} parent=1 // loop_header_branch
      %16 = sbr.rel (%p14) target = $region8
    $region5: #{tpu_custom_call.1} parent=1 // loop_body
      %s18 = ssub.s32 %s13, 1
      %s19 = ssub.s32 %s13, 2
      %s20 = sadd.s32 %s13, 1
      %s21 = ssub.s32 %s13, %s20
      %p22 = scmp.eq.s32.totalorder %s21, 0
      %s24 = sadd.s32 %s23, 1
      %s25 = scalar_select %p22, %s23, %s24
      %p28 = pneg %p22
      %p29 = scmp.eq.s32.totalorder %s13, 1
      %p30 = por %p28, %p29
      %p31 = scmp.ne.s32.totalorder %s23, %s26
      %p32 = scmp.eq.s32.totalorder %s13, 0
      %p33 = por %p31, %p32
      %p34 = scmp.ne.s32.totalorder %s23, %s26
      %p35 = scmp.eq.s32.totalorder %s18, 1
      %p36 = por %p34, %p35
      %p37 = scmp.ne.s32.totalorder %s26, %s27
      %p38 = scmp.eq.s32.totalorder %s18, 0
      %p39 = por %p37, %p38
      %p40 = scmp.ne.s32.totalorder %s26, %s27
      %p41 = scmp.eq.s32.totalorder %s19, 1
      %p42 = por %p40, %p41
      %p44 = scmp.ne.s32.totalorder %s27, %s43
      %p45 = scmp.eq.s32.totalorder %s19, 0
      %p46 = por %p44, %p45
      %s48 = sadd.s32 %s47, 1
      %p51 = scmp.eq.s32.totalorder %s13, 1
      %p52 = scmp.ne.s32.totalorder %s47, %s49
      %p53 = scmp.eq.s32.totalorder %s13, 0
      %p54 = por %p52, %p53
      %p55 = scmp.ne.s32.totalorder %s47, %s49
      %p56 = scmp.eq.s32.totalorder %s18, 1
      %p57 = por %p55, %p56
      %p58 = scmp.ne.s32.totalorder %s49, %s50
      %p59 = scmp.eq.s32.totalorder %s18, 0
      %p60 = por %p58, %p59
      %p61 = scmp.ne.s32.totalorder %s49, %s50
      %p62 = scmp.eq.s32.totalorder %s19, 1
      %p63 = por %p61, %p62
      %p65 = scmp.ne.s32.totalorder %s50, %s64
      %p66 = scmp.eq.s32.totalorder %s19, 0
      %p67 = por %p65, %p66
      %s69 = sadd.s32 %s68, 1
      %p72 = scmp.eq.s32.totalorder %s13, 1
      %p73 = scmp.ne.s32.totalorder %s68, %s70
      %p74 = scmp.eq.s32.totalorder %s13, 0
      %p75 = por %p73, %p74
      %p76 = scmp.ne.s32.totalorder %s68, %s70
      %p77 = scmp.eq.s32.totalorder %s18, 1
      %p78 = por %p76, %p77
      %p79 = scmp.ne.s32.totalorder %s70, %s71
      %p80 = scmp.eq.s32.totalorder %s18, 0
      %p81 = por %p79, %p80
      %p82 = scmp.ne.s32.totalorder %s70, %s71
      %p83 = scmp.eq.s32.totalorder %s19, 1
      %p84 = por %p82, %p83
      %p86 = scmp.ne.s32.totalorder %s71, %s85
      %p87 = scmp.eq.s32.totalorder %s19, 0
      %p88 = por %p86, %p87
      %s89 = ssub.s32 %s13, %s20
      %p90 = scmp.eq.s32.totalorder %s89, 0
      %s92 = sadd.s32 %s91, 1
      %s93 = scalar_select %p90, %s91, %s92
      %p96 = pneg %p90
      %p97 = scmp.eq.s32.totalorder %s13, 1
      %p98 = por %p96, %p97
      %p99 = scmp.ne.s32.totalorder %s91, %s94
      %p100 = scmp.eq.s32.totalorder %s13, 0
      %p101 = por %p99, %p100
      %p102 = scmp.ne.s32.totalorder %s91, %s94
      %p103 = scmp.eq.s32.totalorder %s18, 1
      %p104 = por %p102, %p103
      %p105 = scmp.ne.s32.totalorder %s94, %s95
      %p106 = scmp.eq.s32.totalorder %s18, 0
      %p107 = por %p105, %p106
      %p108 = scmp.ne.s32.totalorder %s94, %s95
      %p109 = scmp.eq.s32.totalorder %s19, 1
      %p110 = por %p108, %p109
      %p112 = scmp.ne.s32.totalorder %s95, %s111
      %p113 = scmp.eq.s32.totalorder %s19, 0
      %p114 = por %p112, %p113
      %p115 = scmp.le.s32.totalorder 1, %s13
      %p116 = scmp.lt.s32.totalorder %s13, 3
      %p117 = pnand %p115, %p116
      %p118 = pneg %p117
      // Predicated region
      $region9: #{tpu_custom_call.1} parent=5 // pred_check
        _
      $region10: #{tpu_custom_call.1} parent=5 // pred_check_branch
        %120 = sbr.rel (%p117) target = $region12
      $region11: #{tpu_custom_call.1} parent=5 // pred_region
        %s121 = ssub.s32 %s13, 1
        // Predicated region
        $region13: #{tpu_custom_call.1} parent=11 // pred_check
          %p122 = pneg %p60
        $region14: #{tpu_custom_call.1} parent=11 // pred_check_branch
          %124 = sbr.rel (%p122) target = $region16
        $region15: #{tpu_custom_call.1} parent=11 // pred_region
          %s126 = ssub.s32 1536, 1536
          %127 = vsyncadd [#allocation6], %s126
          %s128 = sshll.u32 [#allocation5], 4
          %s129 = int_to_ptr.vmem [resolvable:$true] %s128
          %134 = dma.hbm_to_vmem [thread:$0]  %s1, 1536, %s129, [#allocation6], 128, 128, 8
        $region16: #{tpu_custom_call.1} parent=11 // pred_fallthru
          _
        // Predicated region
        $region17: #{tpu_custom_call.1} parent=11 // pred_check
          %p135 = pneg %p81
        $region18: #{tpu_custom_call.1} parent=11 // pred_check_branch
          %137 = sbr.rel (%p135) target = $region20
        $region19: #{tpu_custom_call.1} parent=11 // pred_region
          _
        $region20: #{tpu_custom_call.1} parent=11 // pred_fallthru
          _
      $region12: #{tpu_custom_call.1} parent=5 // pred_fallthru
        _
      %p138 = scmp.lt.s32.totalorder %s13, 2
      // Predicated region
      $region21: #{tpu_custom_call.1} parent=5 // pred_check
        %p139 = pneg %p138
      $region22: #{tpu_custom_call.1} parent=5 // pred_check_branch
        %141 = sbr.rel (%p139) target = $region24
      $region23: #{tpu_custom_call.1} parent=5 // pred_region
        // Predicated region
        $region25: #{tpu_custom_call.1} parent=23 // pred_check
          %p142 = pneg %p33
        $region26: #{tpu_custom_call.1} parent=23 // pred_check_branch
          %144 = sbr.rel (%p142) target = $region28
        $region27: #{tpu_custom_call.1} parent=23 // pred_region
          %s145 = sand.u32 %s23, 1
          %s146 = scalar_lea.sflag [#allocation4], %s145
          %s147 = sand.u32 %s23, 1
          %s148 = smul.addr %s147, 16
          %s149 = scalar_lea.vmem [#allocation3], %s148
          %s151 = ssub.s32 256, 256
          %152 = vsyncadd %s146, %s151
          %s153 = smul.addr %s13, 2
          %s154 = smul.addr %s153, 128
          %s155 = scalar_lea.hbm %s0, %s154
          %s156 = sshll.u32 %s149, 4
          %s157 = int_to_ptr.vmem [resolvable:$true] %s156
          %162 = dma.hbm_to_vmem [thread:$0]  %s155, 256, %s157, %s146, 128, 128, 8
        $region28: #{tpu_custom_call.1} parent=23 // pred_fallthru
          _
      $region24: #{tpu_custom_call.1} parent=5 // pred_fallthru
        _
      %p163 = scmp.le.s32.totalorder 1, %s13
      %p164 = scmp.lt.s32.totalorder %s13, 3
      %p165 = pnand %p163, %p164
      %p166 = pneg %p165
      // Predicated region
      $region29: #{tpu_custom_call.1} parent=5 // pred_check
        _
      $region30: #{tpu_custom_call.1} parent=5 // pred_check_branch
        %168 = sbr.rel (%p165) target = $region32
      $region31: #{tpu_custom_call.1} parent=5 // pred_region
        %s169 = ssub.s32 %s13, 1
        %s170 = sand.u32 %s26, 1
        %s171 = scalar_lea.sflag [#allocation4], %s170
        %s172 = sand.u32 %s26, 1
        %s173 = smul.addr %s172, 16
        %s174 = scalar_lea.vmem [#allocation3], %s173
        // Predicated region
        $region33: #{tpu_custom_call.1} parent=31 // pred_check
          %p175 = pneg %p39
        $region34: #{tpu_custom_call.1} parent=31 // pred_check_branch
          %177 = sbr.rel (%p175) target = $region36
        $region35: #{tpu_custom_call.1} parent=31 // pred_region
          %178 = dma.done %s171, 256
        $region36: #{tpu_custom_call.1} parent=31 // pred_fallthru
          _
        // Predicated region
        $region37: #{tpu_custom_call.1} parent=31 // pred_check
          %p179 = pneg %p60
        $region38: #{tpu_custom_call.1} parent=31 // pred_check_branch
          %181 = sbr.rel (%p179) target = $region40
        $region39: #{tpu_custom_call.1} parent=31 // pred_region
          %182 = dma.done [#allocation6], 1536
        $region40: #{tpu_custom_call.1} parent=31 // pred_fallthru
          _
        %s183 = sand.u32 %s26, 1
        %s184 = scalar_lea.sflag [#allocation4], %s183
        %s185 = sand.u32 %s26, 1
        %s186 = smul.addr %s185, 16
        %s187 = scalar_lea.vmem [#allocation3], %s186
        %p188 = pneg %p39
        %p189 = pneg %p36
        %p190 = pneg %p60
        %p191 = pneg %p57
        %p192 = pneg %p81
        %p193 = pneg %p78
        %p194 = pneg %p107
        %p195 = pneg %p104
        %p196 = scmp.lt.s32.totalorder %s18, 1
        %s197 = scalar_select %p196, %s18, 1
        %s198 = smul.addr %s197, 2
        %s199 = smul.addr %s198, 8
        %s200 = scalar_lea.vmem %s3, %s199
        %p201 = scmp.lt.s32.totalorder %s18, 1
        %s202 = scalar_select %p201, %s18, 1
        %s203 = smul.addr %s202, 2
        %s204 = smul.addr %s203, 8
        %s205 = scalar_lea.vmem %s3, %s204
        %v206 = vld [vmem:[%s174] sm:$0xff]
        %v207 = vld [vmem:[%s174 + $0x8] sm:$0xff]
        %v209 = vrot.slane %v207, 6
        %vm212 = vcmask 1041408
        %v213 = vrot.slane %v206, 6
        %v214 = vsel %vm212, %v213, %v209
        %v216 = vsel %vm212, %v209, %v213
        %v217 = vld [vmem:[#allocation5] sm:$0xff]
        %v218 = vld [vmem:[#allocation5 + $0x8] sm:$0xff]
        %v219 = vld [vmem:[#allocation5 + $0x10] sm:$0xff]
        %v220 = vld [vmem:[#allocation5 + $0x18] sm:$0xff]
        %s221 = scalar_lea.vmem [#allocation5], 32
        %v222 = vld [vmem:[%s221] sm:$0xff]
        %v223 = vld [vmem:[%s221 + $0x8] sm:$0xff]
        %v224 = vld [vmem:[%s221 + $0x10] sm:$0xff]
        %v225 = vld [vmem:[%s221 + $0x18] sm:$0xff]
        %vm227 = vcmask 1046528
        %v228 = vrot.slane %v216, 1
        %v229 = vrot.slane %v214, 1
        %v230 = vsel %vm227, %v228, %v229
        %v231 = vsel %vm227, %v229, %v228
        %vm232 = vcmask 261120
        %v233 = vsel %vm232, %v230, 0
        %v235 = vsel %vm232, %v231, 0
        %v237 = vsel %vm232, %v228, 0
        %239 = vmatprep.subr.mxu0 0.0
        %240 = vmatpush1.msra.mxu0 0.0
        %241 = vmatprep.subr.mxu0 0.0
        %242 = vmatpush1.msra.mxu0 0.0
        %243 = vmatprep.subr.mxu0 0.0
        %244 = vmatpush1.msra.mxu0 0.0
        %245 = vmatprep.subr.mxu0 0.0
        %246 = vmatpush1.msra.mxu0 0.0
        %247 = vmatprep.subr.mxu0 0.0
        %248 = vmatpush1.msra.mxu0 0.0
        %249 = vmatprep.subr.mxu0 0.0
        %250 = vmatpush1.msra.mxu0 0.0
        %251 = vmatprep.subr.mxu0 0.0
        %252 = vmatpush1.msra.mxu0 0.0
        %253 = vmatprep.subr.mxu0 0.0
        %254 = vmatpush1.msra.mxu0 0.0
        %255 = vmatprep.subr.mxu0 0.0
        %256 = vmatpush1.msra.mxu0 0.0
        %257 = vmatprep.subr.mxu0 0.0
        %258 = vmatpush1.msra.mxu0 0.0
        %259 = vmatprep.subr.mxu0 0.0
        %260 = vmatpush1.msra.mxu0 0.0
        %261 = vmatprep.subr.mxu0 0.0
        %262 = vmatpush1.msra.mxu0 0.0
        %263 = vmatprep.subr.mxu0 0.0
        %264 = vmatpush1.msra.mxu0 %v225
        %265 = vmatprep.subr.mxu0 0.0
        %266 = vmatpush1.msra.mxu0 %v224
        %267 = vmatprep.subr.mxu0 0.0
        %268 = vmatpush1.msra.mxu0 %v223
        %269 = vmatprep.subr.mxu0 0.0
        %270 = vmatpush1.msra.mxu0 %v222
        %271 = vmatprep.subr.mxu0 0.0
        %272 = vmatpush2.msra.mxu0 0.0
        %273 = vmatprep.subr.mxu0 0.0
        %274 = vmatpush2.msra.mxu0 0.0
        %275 = vmatprep.subr.mxu0 0.0
        %276 = vmatpush2.msra.mxu0 0.0
        %277 = vmatprep.subr.mxu0 0.0
        %278 = vmatpush2.msra.mxu0 0.0
        %279 = vmatprep.subr.mxu0 0.0
        %280 = vmatpush2.msra.mxu0 0.0
        %281 = vmatprep.subr.mxu0 0.0
        %282 = vmatpush2.msra.mxu0 0.0
        %283 = vmatprep.subr.mxu0 0.0
        %284 = vmatpush2.msra.mxu0 0.0
        %285 = vmatprep.subr.mxu0 0.0
        %286 = vmatpush2.msra.mxu0 0.0
        %287 = vmatprep.subr.mxu0 0.0
        %288 = vmatpush2.msra.mxu0 0.0
        %289 = vmatprep.subr.mxu0 0.0
        %290 = vmatpush2.msra.mxu0 0.0
        %291 = vmatprep.subr.mxu0 0.0
        %292 = vmatpush2.msra.mxu0 0.0
        %293 = vmatprep.subr.mxu0 0.0
        %294 = vmatpush2.msra.mxu0 0.0
        %295 = vmatprep.subr.mxu0 0.0
        %296 = vmatpush2.msra.mxu0 0.0
        %297 = vmatprep.subr.mxu0 0.0
        %298 = vmatpush2.msra.mxu0 0.0
        %299 = vmatprep.subr.mxu0 0.0
        %300 = vmatpush2.msra.mxu0 0.0
        %301 = vmatprep.subr.mxu0 0.0
        %302 = vmatpush2.msra.mxu0 0.0
        %303 = vmatprep.mubr.f32.mxu0 0.0
        %304 = vmatmul.mubr.f32.gmra.mxu0 %v233
        %v305 = vpop.f32.mrf.mxu0
        %v306 = vadd.f32 0.0, %v305
        %v307 = vpop.f32.mrf.mxu0
        %308 = vmatprep.mubr.f32.mxu0 0.0
        %309 = vmatmul.mubr.f32.gmra.mxu0 %v235
        %v310 = vpop.f32.mrf.mxu0
        %v311 = vadd.f32 0.0, %v310
        %v312 = vpop.f32.mrf.mxu0
        %313 = vmatprep.mubr.f32.mxu0 0.0
        %314 = vmatmul.mubr.f32.gmra.mxu0 %v237
        %v315 = vpop.f32.mrf.mxu0
        %v316 = vadd.f32 0.0, %v315
        %v317 = vpop.f32.mrf.mxu0
        %318 = vdwg.mxu0
        %v319 = vsel %vm232, %v216, 0
        %v321 = vsel %vm232, %v214, 0
        %323 = vmatprep.subr.mxu0 0.0
        %324 = vmatpush1.msra.mxu0 0.0
        %325 = vmatprep.subr.mxu0 0.0
        %326 = vmatpush1.msra.mxu0 0.0
        %327 = vmatprep.subr.mxu0 0.0
        %328 = vmatpush1.msra.mxu0 0.0
        %329 = vmatprep.subr.mxu0 0.0
        %330 = vmatpush1.msra.mxu0 0.0
        %331 = vmatprep.subr.mxu0 0.0
        %332 = vmatpush1.msra.mxu0 0.0
        %333 = vmatprep.subr.mxu0 0.0
        %334 = vmatpush1.msra.mxu0 0.0
        %335 = vmatprep.subr.mxu0 0.0
        %336 = vmatpush1.msra.mxu0 0.0
        %337 = vmatprep.subr.mxu0 0.0
        %338 = vmatpush1.msra.mxu0 0.0
        %339 = vmatprep.subr.mxu0 0.0
        %340 = vmatpush1.msra.mxu0 0.0
        %341 = vmatprep.subr.mxu0 0.0
        %342 = vmatpush1.msra.mxu0 0.0
        %343 = vmatprep.subr.mxu0 0.0
        %344 = vmatpush1.msra.mxu0 0.0
        %345 = vmatprep.subr.mxu0 0.0
        %346 = vmatpush1.msra.mxu0 0.0
        %347 = vmatprep.subr.mxu0 0.0
        %348 = vmatpush1.msra.mxu0 %v220
        %349 = vmatprep.subr.mxu0 0.0
        %350 = vmatpush1.msra.mxu0 %v219
        %351 = vmatprep.subr.mxu0 0.0
        %352 = vmatpush1.msra.mxu0 %v218
        %353 = vmatprep.subr.mxu0 0.0
        %354 = vmatpush1.msra.mxu0 %v217
        %355 = vmatprep.subr.mxu0 0.0
        %356 = vmatpush2.msra.mxu0 0.0
        %357 = vmatprep.subr.mxu0 0.0
        %358 = vmatpush2.msra.mxu0 0.0
        %359 = vmatprep.subr.mxu0 0.0
        %360 = vmatpush2.msra.mxu0 0.0
        %361 = vmatprep.subr.mxu0 0.0
        %362 = vmatpush2.msra.mxu0 0.0
        %363 = vmatprep.subr.mxu0 0.0
        %364 = vmatpush2.msra.mxu0 0.0
        %365 = vmatprep.subr.mxu0 0.0
        %366 = vmatpush2.msra.mxu0 0.0
        %367 = vmatprep.subr.mxu0 0.0
        %368 = vmatpush2.msra.mxu0 0.0
        %369 = vmatprep.subr.mxu0 0.0
        %370 = vmatpush2.msra.mxu0 0.0
        %371 = vmatprep.subr.mxu0 0.0
        %372 = vmatpush2.msra.mxu0 0.0
        %373 = vmatprep.subr.mxu0 0.0
        %374 = vmatpush2.msra.mxu0 0.0
        %375 = vmatprep.subr.mxu0 0.0
        %376 = vmatpush2.msra.mxu0 0.0
        %377 = vmatprep.subr.mxu0 0.0
        %378 = vmatpush2.msra.mxu0 0.0
        %379 = vmatprep.subr.mxu0 0.0
        %380 = vmatpush2.msra.mxu0 0.0
        %381 = vmatprep.subr.mxu0 0.0
        %382 = vmatpush2.msra.mxu0 0.0
        %383 = vmatprep.subr.mxu0 0.0
        %384 = vmatpush2.msra.mxu0 0.0
        %385 = vmatprep.subr.mxu0 0.0
        %386 = vmatpush2.msra.mxu0 0.0
        %387 = vmatprep.mubr.f32.mxu0 0.0
        %388 = vmatmul.mubr.f32.gmra.mxu0 %v319
        %v389 = vpop.f32.mrf.mxu0
        %v390 = vadd.f32 %v306, %v389
        %v391 = vpop.f32.mrf.mxu0
        %392 = vmatprep.mubr.f32.mxu0 0.0
        %393 = vmatmul.mubr.f32.gmra.mxu0 %v321
        %v394 = vpop.f32.mrf.mxu0
        %v395 = vadd.f32 %v311, %v394
        %v396 = vpop.f32.mrf.mxu0
        %397 = vmatprep.mubr.f32.mxu0 0.0
        %398 = vmatmul.mubr.f32.gmra.mxu0 %v319
        %v399 = vpop.f32.mrf.mxu0
        %v400 = vadd.f32 %v316, %v399
        %v401 = vpop.f32.mrf.mxu0
        %402 = vdwg.mxu0
        %s403 = scalar_lea.vmem [#allocation5], 64
        %v404 = vld [vmem:[%s403] sm:$0xff]
        %v405 = vld [vmem:[%s403 + $0x8] sm:$0xff]
        %v406 = vld [vmem:[%s403 + $0x10] sm:$0xff]
        %v407 = vld [vmem:[%s403 + $0x18] sm:$0xff]
        %vm408 = vcmask 1045504
        %v409 = vrot.slane %v216, 2
        %v410 = vrot.slane %v214, 2
        %v411 = vsel %vm408, %v409, %v410
        %v412 = vsel %vm408, %v410, %v409
        %v413 = vsel %vm232, %v411, 0
        %v415 = vsel %vm232, %v412, 0
        %v417 = vsel %vm232, %v409, 0
        %419 = vmatprep.subr.mxu0 0.0
        %420 = vmatpush1.msra.mxu0 0.0
        %421 = vmatprep.subr.mxu0 0.0
        %422 = vmatpush1.msra.mxu0 0.0
        %423 = vmatprep.subr.mxu0 0.0
        %424 = vmatpush1.msra.mxu0 0.0
        %425 = vmatprep.subr.mxu0 0.0
        %426 = vmatpush1.msra.mxu0 0.0
        %427 = vmatprep.subr.mxu0 0.0
        %428 = vmatpush1.msra.mxu0 0.0
        %429 = vmatprep.subr.mxu0 0.0
        %430 = vmatpush1.msra.mxu0 0.0
        %431 = vmatprep.subr.mxu0 0.0
        %432 = vmatpush1.msra.mxu0 0.0
        %433 = vmatprep.subr.mxu0 0.0
        %434 = vmatpush1.msra.mxu0 0.0
        %435 = vmatprep.subr.mxu0 0.0
        %436 = vmatpush1.msra.mxu0 0.0
        %437 = vmatprep.subr.mxu0 0.0
        %438 = vmatpush1.msra.mxu0 0.0
        %439 = vmatprep.subr.mxu0 0.0
        %440 = vmatpush1.msra.mxu0 0.0
        %441 = vmatprep.subr.mxu0 0.0
        %442 = vmatpush1.msra.mxu0 0.0
        %443 = vmatprep.subr.mxu0 0.0
        %444 = vmatpush1.msra.mxu0 %v407
        %445 = vmatprep.subr.mxu0 0.0
        %446 = vmatpush1.msra.mxu0 %v406
        %447 = vmatprep.subr.mxu0 0.0
        %448 = vmatpush1.msra.mxu0 %v405
        %449 = vmatprep.subr.mxu0 0.0
        %450 = vmatpush1.msra.mxu0 %v404
        %451 = vmatprep.subr.mxu0 0.0
        %452 = vmatpush2.msra.mxu0 0.0
        %453 = vmatprep.subr.mxu0 0.0
        %454 = vmatpush2.msra.mxu0 0.0
        %455 = vmatprep.subr.mxu0 0.0
        %456 = vmatpush2.msra.mxu0 0.0
        %457 = vmatprep.subr.mxu0 0.0
        %458 = vmatpush2.msra.mxu0 0.0
        %459 = vmatprep.subr.mxu0 0.0
        %460 = vmatpush2.msra.mxu0 0.0
        %461 = vmatprep.subr.mxu0 0.0
        %462 = vmatpush2.msra.mxu0 0.0
        %463 = vmatprep.subr.mxu0 0.0
        %464 = vmatpush2.msra.mxu0 0.0
        %465 = vmatprep.subr.mxu0 0.0
        %466 = vmatpush2.msra.mxu0 0.0
        %467 = vmatprep.subr.mxu0 0.0
        %468 = vmatpush2.msra.mxu0 0.0
        %469 = vmatprep.subr.mxu0 0.0
        %470 = vmatpush2.msra.mxu0 0.0
        %471 = vmatprep.subr.mxu0 0.0
        %472 = vmatpush2.msra.mxu0 0.0
        %473 = vmatprep.subr.mxu0 0.0
        %474 = vmatpush2.msra.mxu0 0.0
        %475 = vmatprep.subr.mxu0 0.0
        %476 = vmatpush2.msra.mxu0 0.0
        %477 = vmatprep.subr.mxu0 0.0
        %478 = vmatpush2.msra.mxu0 0.0
        %479 = vmatprep.subr.mxu0 0.0
        %480 = vmatpush2.msra.mxu0 0.0
        %481 = vmatprep.subr.mxu0 0.0
        %482 = vmatpush2.msra.mxu0 0.0
        %483 = vmatprep.mubr.f32.mxu0 0.0
        %484 = vmatmul.mubr.f32.gmra.mxu0 %v413
        %v485 = vpop.f32.mrf.mxu0
        %v486 = vadd.f32 0.0, %v485
        %v487 = vpop.f32.mrf.mxu0
        %488 = vmatprep.mubr.f32.mxu0 0.0
        %489 = vmatmul.mubr.f32.gmra.mxu0 %v415
        %v490 = vpop.f32.mrf.mxu0
        %v491 = vadd.f32 0.0, %v490
        %v492 = vpop.f32.mrf.mxu0
        %493 = vmatprep.mubr.f32.mxu0 0.0
        %494 = vmatmul.mubr.f32.gmra.mxu0 %v417
        %v495 = vpop.f32.mrf.mxu0
        %v496 = vadd.f32 0.0, %v495
        %v497 = vpop.f32.mrf.mxu0
        %498 = vdwg.mxu0
        %v499 = vadd.f32 %v390, %v486
        %v500 = vadd.f32 %v395, %v491
        %v501 = vadd.f32 %v400, %v496
        %v502 = vld [vmem:[%s2] sm:$0x1]
        %v504 = vlaneseq
        %v505 = vshrl.u32 %v504, 7
        %v506 = vsub.s32 0, %v505
        %v507 = vrot.slane %v502, %v506
        %v509 = vadd.f32 %v499, %v507
        %v510 = vadd.f32 %v500, %v507
        %v511 = vadd.f32 %v501, %v507
        %vm512 = vcmp.gt.f32.partialorder %v509, 0.0
        %vm513 = vcmp.gt.f32.partialorder %v510, 0.0
        %vm514 = vcmp.gt.f32.partialorder %v511, 0.0
        %v515 = vmin.f32 %v509, 0.0
        %v516 = vmin.f32 %v510, 0.0
        %v517 = vmin.f32 %v511, 0.0
        %v518 = vmul.f32 %v515, 1.442695
        %v519 = vpow.pop %v518
        %v520 = vmul.f32 %v516, 1.442695
        %v521 = vpow.pop %v520
        %v522 = vmul.f32 %v517, 1.442695
        %v523 = vpow.pop %v522
        %v524 = vsub.f32 %v519, 1.0
        %v525 = vsub.f32 %v521, 1.0
        %v526 = vsub.f32 %v523, 1.0
        %v527 = vsel %vm512, %v509, %v524
        %v528 = vsel %vm513, %v510, %v525
        %v529 = vsel %vm514, %v511, %v526
        %vm533 = vcmask 1040384
        %v534 = vrot.slane %v527, 7
        %v535 = vrot.slane %v528, 7
        %v536 = vsel %vm533, %v534, %v535
        %v537 = vrot.slane %v529, 7
        %v538 = vsel %vm533, %v535, %v537
        %v542 = vsel %vm533, -inf, %v534
        %vm543 = vcmask 1042432
        %v544 = vsel %vm543, %v538, -inf
        %v547 = vrot.slane %v542, 1
        %v548 = vrot.slane %v536, 1
        %v549 = vsel %vm227, %v547, %v548
        %v550 = vrot.slane %v544, 1
        %v551 = vsel %vm227, %v548, %v550
        %v555 = vmax.f32 %v542, %v549
        %v556 = vmax.f32 %v536, %v551
        %v557 = vmax.f32 %v544, %v550
        %v558 = vrot.slane %v542, 2
        %v559 = vrot.slane %v536, 2
        %v560 = vsel %vm408, %v558, %v559
        %v561 = vrot.slane %v544, 2
        %v562 = vsel %vm408, %v559, %v561
        %v566 = vmax.f32 %v555, %v560
        %v567 = vmax.f32 %v556, %v562
        %v568 = vmax.f32 %v557, %v561
        %569 = vst.msk [vmem:[#allocation2] sm:$0xff] %vm232, %v566
        %570 = vst.msk [vmem:[#allocation2 + $0x8] sm:$0xff] %vm232, %v567
        %vm571 = vcmask 254976
        %572 = vst.msk [vmem:[#allocation2 + $0x10] sm:$0x3] %vm571, %v568
        %v573 = vld [vmem:[#allocation2] ss:$2 sm:$0xff]
        %s574 = scalar_lea.vmem [#allocation2], 16
        %v575 = vld [vmem:[%s574] ss:$2 sm:$0x1]
        %576 = vst.msk [vmem:[%s205] sm:$0xff] %vm232, %v573
        %vm577 = vcmask 253952
        %578 = vst.msk [vmem:[%s205 + $0x8] sm:$0x1] %vm577, %v575
        %p579 = scmp.lt.s32.totalorder %s18, 1
        %s580 = scalar_select %p579, %s18, 1
        %s581 = smul.addr %s580, 2
        %s582 = smul.addr %s581, 8
        %s583 = scalar_lea.vmem %s3, %s582
        // Predicated region
        $region41: #{tpu_custom_call.1} parent=31 // pred_check
          %p584 = pneg %p104
        $region42: #{tpu_custom_call.1} parent=31 // pred_check_branch
          %586 = sbr.rel (%p584) target = $region44
        $region43: #{tpu_custom_call.1} parent=31 // pred_region
          _
        $region44: #{tpu_custom_call.1} parent=31 // pred_fallthru
          _
      $region32: #{tpu_custom_call.1} parent=5 // pred_fallthru
        _
      %p587 = scmp.le.s32.totalorder 2, %s13
      // Predicated region
      $region45: #{tpu_custom_call.1} parent=5 // pred_check
        %p588 = pneg %p587
      $region46: #{tpu_custom_call.1} parent=5 // pred_check_branch
        %590 = sbr.rel (%p588) target = $region48
      $region47: #{tpu_custom_call.1} parent=5 // pred_region
        %s591 = ssub.s32 %s13, 2
        // Predicated region
        $region49: #{tpu_custom_call.1} parent=47 // pred_check
          %p592 = pneg %p110
        $region50: #{tpu_custom_call.1} parent=47 // pred_check_branch
          %594 = sbr.rel (%p592) target = $region52
        $region51: #{tpu_custom_call.1} parent=47 // pred_region
          %p595 = scmp.lt.s32.totalorder %s19, 1
          %s596 = scalar_select %p595, %s19, 1
          %s597 = smul.addr %s596, 2
          %s598 = smul.addr %s597, 8
          %s599 = scalar_lea.vmem %s3, %s598
        $region52: #{tpu_custom_call.1} parent=47 // pred_fallthru
          _
      $region48: #{tpu_custom_call.1} parent=5 // pred_fallthru
        _
    $region6: #{tpu_custom_call.1} parent=1 // loop_footer
      %s17 = sadd.s32 1, %s13
    $region7: #{tpu_custom_call.1} parent=1 // loop_footer_branch
      %12 = sbr.rel target = $region3
    $region8: #{tpu_custom_call.1} parent=1 // loop_exit
      _
    %600 = vsyncpa [#allocation4], 1
    %s601 = scalar_lea.sflag [#allocation4], 1
    %602 = vsyncpa %s601, 1
    %603 = vsyncpa [#allocation6], 1

</llo_original>
